<compile_context>
chip_gen: v6e
topology: v6e:2x2x1
jax: 0.10.0
libtpu: 0.0.40
codegen_flags: <defaults>
</compile_context>

<pallas_src>
import functools

import jax
import jax.numpy as jnp
from jax.experimental import pallas as pl
from jax.experimental.pallas import tpu as pltpu


def _feat_bottleneck_kernel(x_ref, wt_ref, p_ref, o_ref, *,
                            apply_bn: bool, inv_b: float):
    # Linear: (B, F) @ (F, D) on the MXU, f32 accumulation, + bias row.
    y = jnp.dot(x_ref[...], wt_ref[...], preferred_element_type=jnp.float32)
    y = y + p_ref[0:1, :]

    if apply_bn:
        # BatchNorm1d (training-mode batch stats, biased variance, eps=1e-5).
        # 1/B is a compile-time constant; gamma folded into inv-std so only one
        # (B, D)-sized multiply + one add hit the VPU in the epilogue.
        mean = jnp.sum(y, axis=0, keepdims=True) * inv_b
        centered = y - mean
        var = jnp.sum(centered * centered, axis=0, keepdims=True) * inv_b
        scale = jax.lax.rsqrt(var + 1e-5) * p_ref[1:2, :]
        y = centered * scale + p_ref[2:3, :]

    o_ref[...] = y.astype(o_ref.dtype)


def prepare_params(weight, bias, bn_gamma=None, bn_beta=None, type='ori'):
    """One-time parameter packing (call at init, NOT per forward):
       - pre-transpose weight (D, F) -> (F, D) so the kernel does x @ Wt directly
       - pack bias [+ gamma, beta] into a single (P, D) lane-dense slab (1 DMA).
         On the 'ori' path gamma/beta are never shipped."""
    D = weight.shape[0]
    wt = jnp.asarray(weight).T                                   # (F, D)
    if type == 'bn':
        params = jnp.stack([bias, bn_gamma, bn_beta], axis=0)    # (3, D)
    else:
        params = bias.reshape(1, D)                              # (1, D)
    return wt, params


def feat_bottleneck_forward(x, wt, params, type='ori'):
    """x: (B, F); wt: (F, D) pre-transposed weight; params: packed (1|3, D)."""
    B = x.shape[0]
    D = wt.shape[1]

    kernel = functools.partial(
        _feat_bottleneck_kernel, apply_bn=(type == 'bn'), inv_b=1.0 / B)

    # Gridless call: single invocation, full arrays resident in VMEM.
    # No pipeline prologue/epilogue and no size-1 grid axis — at these shapes
    # the kernel is launch/DMA-latency bound, so the machinery is pure overhead.
    # (If B ever scales up, tile over B with a parallel grid axis for the 'ori'
    #  path only; the BN path needs the whole batch in one block for exact stats.)
    return pl.pallas_call(
        kernel,
        out_shape=jax.ShapeDtypeStruct((B, D), x.dtype),
        in_specs=[
            pl.BlockSpec(memory_space=pltpu.MemorySpace.VMEM),   # x
            pl.BlockSpec(memory_space=pltpu.MemorySpace.VMEM),   # wt
            pl.BlockSpec(memory_space=pltpu.MemorySpace.VMEM),   # packed params
        ],
        out_specs=pl.BlockSpec(memory_space=pltpu.MemorySpace.VMEM),
    )(x, wt, params)


def _reference_forward(x, weight, bias, bn_gamma, bn_beta, type='ori'):
    y = x @ weight.T + bias
    if type == 'bn':
        mean = jnp.mean(y, axis=0, keepdims=True)
        var = jnp.mean((y - mean) ** 2, axis=0, keepdims=True)
        y = (y - mean) * jax.lax.rsqrt(var + 1e-5) * bn_gamma + bn_beta
    return y


if __name__ == "__main__":
    # Small, module-consistent shapes.
    batch = 8
    feature_dim = 32
    bottleneck_dim = 256

    key = jax.random.PRNGKey(0)
    k_x, k_w, k_bn = jax.random.split(key, 3)

    x = jax.random.normal(k_x, (batch, feature_dim), dtype=jnp.float32)

    # Deterministic parameter init matching init_weights():
    #   Linear: xavier_normal_ weight, zero bias.
    xavier_std = (2.0 / (feature_dim + bottleneck_dim)) ** 0.5
    weight = xavier_std * jax.random.normal(
        k_w, (bottleneck_dim, feature_dim), dtype=jnp.float32)
    bias = jnp.zeros((bottleneck_dim,), dtype=jnp.float32)

    #   BatchNorm1d: weight ~ N(1.0, 0.02), bias zeros.
    bn_gamma = 1.0 + 0.02 * jax.random.normal(
        k_bn, (bottleneck_dim,), dtype=jnp.float32)
    bn_beta = jnp.zeros((bottleneck_dim,), dtype=jnp.float32)

    # Pre-pack params once (transpose + bias/gamma/beta slab) — init-time cost.
    wt_ori, params_ori = prepare_params(weight, bias, type='ori')
    wt_bn, params_bn = prepare_params(weight, bias, bn_gamma, bn_beta, type='bn')

    # type='ori' (default path): Linear only.
    out_ori = feat_bottleneck_forward(x, wt_ori, params_ori, type='ori')
    out_ori = jax.block_until_ready(out_ori)
    ref_ori = _reference_forward(x, weight, bias, bn_gamma, bn_beta, type='ori')

    # type='bn' path: Linear + BatchNorm1d (batch statistics).
    out_bn = feat_bottleneck_forward(x, wt_bn, params_bn, type='bn')
    out_bn = jax.block_until_ready(out_bn)
    ref_bn = _reference_forward(x, weight, bias, bn_gamma, bn_beta, type='bn')

    assert out_ori.shape == (batch, bottleneck_dim)
    assert out_bn.shape == (batch, bottleneck_dim)
    assert jnp.allclose(out_ori, ref_ori, atol=1e-4, rtol=1e-4)
    assert jnp.allclose(out_bn, ref_bn, atol=1e-4, rtol=1e-4)

    print("KERNEL_OK")
</pallas_src>

<mosaic_0001>
module attributes {stable_mosaic.version = 11 : i64} {
  func.func @_feat_bottleneck_kernel(%arg0: memref<8x32xf32, #tpu.memory_space<vmem>>, %arg1: memref<32x256xf32, #tpu.memory_space<vmem>>, %arg2: memref<1x256xf32, #tpu.memory_space<vmem>>, %arg3: memref<8x256xf32, #tpu.memory_space<vmem>>) attributes {dimension_semantics = [], scalar_prefetch = 0 : i64, scratch_operands = 0 : i64, tpu.core_type = #tpu.core_type<tc>} {
    %c0 = arith.constant 0 : index
    %c0_0 = arith.constant 0 : index
    %0 = vector.load %arg0[%c0, %c0_0] : memref<8x32xf32, #tpu.memory_space<vmem>>, vector<8x32xf32>
    %c0_1 = arith.constant 0 : index
    %c0_2 = arith.constant 0 : index
    %1 = vector.load %arg1[%c0_1, %c0_2] : memref<32x256xf32, #tpu.memory_space<vmem>>, vector<32x256xf32>
    %cst = arith.constant dense<0.000000e+00> : vector<8x256xf32>
    %2 = tpu.matmul %0, %1, %cst {dimension_numbers = #tpu.dot_dimension_numbers<[1], [0], [0], [1], [0, 0, 1, 1], [], []>} : vector<8x32xf32>, vector<32x256xf32>, vector<8x256xf32> -> vector<8x256xf32>
    %c0_3 = arith.constant 0 : index
    %c0_4 = arith.constant 0 : index
    %3 = vector.load %arg2[%c0_3, %c0_4] : memref<1x256xf32, #tpu.memory_space<vmem>>, vector<1x256xf32>
    %4 = vector.broadcast %3 : vector<1x256xf32> to vector<8x256xf32>
    %5 = arith.addf %2, %4 : vector<8x256xf32>
    %c0_5 = arith.constant 0 : index
    %c0_6 = arith.constant 0 : index
    %6 = vector.load %arg3[%c0_5, %c0_6] : memref<8x256xf32, #tpu.memory_space<vmem>>, vector<8x256xf32>
    tpu.vector_store %arg3[%c0_5, %c0_6], %5 {strides = array<i32>} : memref<8x256xf32, #tpu.memory_space<vmem>>, vector<8x256xf32>,
    return
  }
}

</mosaic_0001>

<llo_original>
// kernel: tpu_custom_call.1
$region0: #{tpu_custom_call.1}
  #allocation0 [shape = 'u32[]', space=smem, size = 0x4, offset = 0x4, fixed_abs, tag = 'smem constant byte address 0x4 - core index']
  #allocation1 [shape = 'u32[144,128]{1,0:T(1,128)}', space=vmem, size = 0x12000, scoped, tag = 'internal scratch']
  %s0 = inlined_call_operand.hbm [shape: f32[8,32], index: 0, kind: input, shape index: {}]
  %s1 = inlined_call_operand.hbm [shape: f32[32,256], index: 1, kind: input, shape index: {}]
  %s2 = inlined_call_operand.vmem [shape: f32[1,256], index: 2, kind: input, shape index: {}]
  %s3 = inlined_call_operand.hbm [shape: f32[8,256], index: 3, kind: output, shape index: {}]
  %s4 = sld [smem:[#allocation0]]
  $region30: #{tpu_custom_call.1} parent=0
    _
  %s6 = ssub.s32 1, %s4
  %s7 = scalar_select 0, %s6, %s4
  $region1: #{tpu_custom_call.1} parent=0
    #allocation2 [shape = 'u8[4096]{0}', space=vmem, size = 0x1000, scoped, tag = 'input window, operand 0, single buffered']
    #allocation3 [shape = 's32[1]{0}', space=sflag, size = 0x4, scoped, tag = 'scoped memory for tpu_custom_call.1']
    #allocation4 [shape = 's32[1]{0}', space=sflag, size = 0x4, scoped, tag = 'scoped memory for tpu_custom_call.1']
    #allocation5 [shape = 'u8[32768]{0}', space=vmem, size = 0x8000, scoped, tag = 'input window, operand 1, single buffered']
    #allocation6 [shape = 's32[1]{0}', space=sflag, size = 0x4, scoped, tag = 'scoped memory for tpu_custom_call.1']
    #allocation7 [shape = 'u8[8192]{0}', space=vmem, size = 0x2000, scoped, tag = 'output window, operand 0, single buffered']
    %8 = vsyncpa [#allocation3], 0
    %9 = vsyncpa [#allocation6], 0
    %10 = vsyncpa [#allocation4], 0
    // Predicated region
    $region2: #{tpu_custom_call.1} parent=1 // pred_check
      _
    $region3: #{tpu_custom_call.1} parent=1 // pred_check_branch
      %12 = sbr.rel (0) target = $region5
    $region4: #{tpu_custom_call.1} parent=1 // pred_region
      %s14 = ssub.s32 128, 128
      %15 = vsyncadd [#allocation3], %s14
      %s17 = sshll.u32 [#allocation2], 4
      %s18 = int_to_ptr.vmem [resolvable:$true] %s17
      %20 = dma.hbm_to_vmem [thread:$0]  %s0, 128, %s18, [#allocation3]
    $region5: #{tpu_custom_call.1} parent=1 // pred_fallthru
      _
    // Predicated region
    $region6: #{tpu_custom_call.1} parent=1 // pred_check
      _
    $region7: #{tpu_custom_call.1} parent=1 // pred_check_branch
      %22 = sbr.rel (0) target = $region9
    $region8: #{tpu_custom_call.1} parent=1 // pred_region
      %s24 = ssub.s32 1024, 1024
      %25 = vsyncadd [#allocation6], %s24
      %s26 = sshll.u32 [#allocation5], 4
      %s27 = int_to_ptr.vmem [resolvable:$true] %s26
      %32 = dma.hbm_to_vmem [thread:$0]  %s1, 1024, %s27, [#allocation6], 256, 256, 16
    $region9: #{tpu_custom_call.1} parent=1 // pred_fallthru
      _
    // Predicated region
    $region10: #{tpu_custom_call.1} parent=1 // pred_check
      _
    $region11: #{tpu_custom_call.1} parent=1 // pred_check_branch
      %34 = sbr.rel (0) target = $region13
    $region12: #{tpu_custom_call.1} parent=1 // pred_region
      _
    $region13: #{tpu_custom_call.1} parent=1 // pred_fallthru
      _
    // Predicated region
    $region14: #{tpu_custom_call.1} parent=1 // pred_check
      _
    $region15: #{tpu_custom_call.1} parent=1 // pred_check_branch
      %36 = sbr.rel (0) target = $region17
    $region16: #{tpu_custom_call.1} parent=1 // pred_region
      %37 = dma.done [#allocation3], 128
    $region17: #{tpu_custom_call.1} parent=1 // pred_fallthru
      _
    // Predicated region
    $region18: #{tpu_custom_call.1} parent=1 // pred_check
      _
    $region19: #{tpu_custom_call.1} parent=1 // pred_check_branch
      %39 = sbr.rel (0) target = $region21
    $region20: #{tpu_custom_call.1} parent=1 // pred_region
      %40 = dma.done [#allocation6], 1024
    $region21: #{tpu_custom_call.1} parent=1 // pred_fallthru
      _
    %v41 = vld [vmem:[#allocation2] sm:$0xff]
    %v42 = vld [vmem:[#allocation5] sm:$0xff]
    %v43 = vld [vmem:[#allocation5 + $0x8] sm:$0xff]
    %v44 = vld [vmem:[#allocation5 + $0x10] sm:$0xff]
    %v45 = vld [vmem:[#allocation5 + $0x18] sm:$0xff]
    %v46 = vld [vmem:[#allocation5 + $0x20] sm:$0xff]
    %v47 = vld [vmem:[#allocation5 + $0x28] sm:$0xff]
    %v48 = vld [vmem:[#allocation5 + $0x30] sm:$0xff]
    %v49 = vld [vmem:[#allocation5 + $0x38] sm:$0xff]
    %v50 = vld [vmem:[%s2] sm:$0x3]
    %v52 = vlaneseq
    %v53 = vshrl.u32 %v52, 7
    %v54 = vsub.s32 0, %v53
    %v55 = vrot.slane %v50, %v54
    %v56 = vlaneseq
    %v57 = vshrl.u32 %v56, 7
    %v58 = vsub.s32 1, %v57
    %v59 = vrot.slane %v50, %v58
    %vm62 = vcmask 261120
    %v64 = vsel %vm62, %v41, 0
    %66 = vmatprep.subr.mxu0 0.0
    %67 = vmatpush1.msra.mxu0 0.0
    %68 = vmatprep.subr.mxu0 0.0
    %69 = vmatpush1.msra.mxu0 0.0
    %70 = vmatprep.subr.mxu0 0.0
    %71 = vmatpush1.msra.mxu0 0.0
    %72 = vmatprep.subr.mxu0 0.0
    %73 = vmatpush1.msra.mxu0 0.0
    %74 = vmatprep.subr.mxu0 0.0
    %75 = vmatpush1.msra.mxu0 0.0
    %76 = vmatprep.subr.mxu0 0.0
    %77 = vmatpush1.msra.mxu0 0.0
    %78 = vmatprep.subr.mxu0 0.0
    %79 = vmatpush1.msra.mxu0 0.0
    %80 = vmatprep.subr.mxu0 0.0
    %81 = vmatpush1.msra.mxu0 0.0
    %82 = vmatprep.subr.mxu0 0.0
    %83 = vmatpush1.msra.mxu0 0.0
    %84 = vmatprep.subr.mxu0 0.0
    %85 = vmatpush1.msra.mxu0 0.0
    %86 = vmatprep.subr.mxu0 0.0
    %87 = vmatpush1.msra.mxu0 0.0
    %88 = vmatprep.subr.mxu0 0.0
    %89 = vmatpush1.msra.mxu0 0.0
    %90 = vmatprep.subr.mxu0 %v49
    %91 = vmatpush1.msra.mxu0 %v48
    %92 = vmatprep.subr.mxu0 %v47
    %93 = vmatpush1.msra.mxu0 %v46
    %94 = vmatprep.subr.mxu0 %v45
    %95 = vmatpush1.msra.mxu0 %v44
    %96 = vmatprep.subr.mxu0 %v43
    %97 = vmatpush1.msra.mxu0 %v42
    %98 = vmatprep.subr.mxu0 0.0
    %99 = vmatpush2.msra.mxu0 0.0
    %100 = vmatprep.subr.mxu0 0.0
    %101 = vmatpush2.msra.mxu0 0.0
    %102 = vmatprep.subr.mxu0 0.0
    %103 = vmatpush2.msra.mxu0 0.0
    %104 = vmatprep.subr.mxu0 0.0
    %105 = vmatpush2.msra.mxu0 0.0
    %106 = vmatprep.subr.mxu0 0.0
    %107 = vmatpush2.msra.mxu0 0.0
    %108 = vmatprep.subr.mxu0 0.0
    %109 = vmatpush2.msra.mxu0 0.0
    %110 = vmatprep.subr.mxu0 0.0
    %111 = vmatpush2.msra.mxu0 0.0
    %112 = vmatprep.subr.mxu0 0.0
    %113 = vmatpush2.msra.mxu0 0.0
    %114 = vmatprep.subr.mxu0 0.0
    %115 = vmatpush2.msra.mxu0 0.0
    %116 = vmatprep.subr.mxu0 0.0
    %117 = vmatpush2.msra.mxu0 0.0
    %118 = vmatprep.subr.mxu0 0.0
    %119 = vmatpush2.msra.mxu0 0.0
    %120 = vmatprep.subr.mxu0 0.0
    %121 = vmatpush2.msra.mxu0 0.0
    %122 = vmatprep.subr.mxu0 0.0
    %123 = vmatpush2.msra.mxu0 0.0
    %124 = vmatprep.subr.mxu0 0.0
    %125 = vmatpush2.msra.mxu0 0.0
    %126 = vmatprep.subr.mxu0 0.0
    %127 = vmatpush2.msra.mxu0 0.0
    %128 = vmatprep.subr.mxu0 0.0
    %129 = vmatpush2.msra.mxu0 0.0
    %130 = vmatprep.mubr.f32.mxu0 0.0
    %131 = vmatmul.mubr.f32.gmra.mxu0 %v64
    %v132 = vpop.f32.mrf.mxu0
    %v133 = vadd.f32 %v55, %v132
    %v134 = vpop.f32.mrf.mxu0
    %v135 = vadd.f32 %v59, %v134
    %136 = vdwg.mxu0
    %137 = vst [vmem:[#allocation7] sm:$0xff] %v133
    %138 = vst [vmem:[#allocation7 + $0x8] sm:$0xff] %v135
    // Predicated region
    $region22: #{tpu_custom_call.1} parent=1 // pred_check
      _
    $region23: #{tpu_custom_call.1} parent=1 // pred_check_branch
      %140 = sbr.rel (0) target = $region25
    $region24: #{tpu_custom_call.1} parent=1 // pred_region
      %s142 = ssub.s32 256, 256
      %143 = vsyncadd [#allocation4], %s142
      %s145 = sshll.u32 [#allocation7], 4
      %s146 = int_to_ptr.vmem [resolvable:$true] %s145
      %148 = dma.vmem_to_hbm [thread:$0]  %s146, 256, %s3, [#allocation4]
    $region25: #{tpu_custom_call.1} parent=1 // pred_fallthru
      _
    // Predicated region
    $region26: #{tpu_custom_call.1} parent=1 // pred_check
      _
    $region27: #{tpu_custom_call.1} parent=1 // pred_check_branch
      %150 = sbr.rel (0) target = $region29
    $region28: #{tpu_custom_call.1} parent=1 // pred_region
      %151 = dma.done [#allocation4], 256
    $region29: #{tpu_custom_call.1} parent=1 // pred_fallthru
      _
    %152 = vsyncpa [#allocation3], 1
    %153 = vsyncpa [#allocation6], 1
    %154 = vsyncpa [#allocation4], 1

</llo_original>
